<compile_context>
chip_gen: v7x
topology: tpu7x:2x2x1
jax: 0.10.0
libtpu: 0.0.40
codegen_flags: <defaults>
</compile_context>

<pallas_src>
import numpy as np
import jax
import jax.numpy as jnp
from jax import lax
from jax.experimental import pallas as pl
from jax.experimental.pallas import tpu as pltpu


def _round_up(n, m):
    return (n + m - 1) // m * m


def logit_head_kernel(x_ref, w_ref, invn_ref, b_ref, o_ref):
    # x_ref:    (tm, Dp) bf16 un-normalized input rows
    # w_ref:    (Dp, tn) bf16 weight columns (W^T, zero-padded)
    # invn_ref: (tm, 1)  f32  exp(logit_scale) / max(||x_row||, 1e-12)
    # b_ref:    (1, tn)  f32  bias * exp(logit_scale)
    # o_ref:    (tm, tn) logits tile
    acc = jnp.dot(x_ref[...], w_ref[...], preferred_element_type=jnp.float32)
    o_ref[...] = (acc * invn_ref[...] + b_ref[...]).astype(o_ref.dtype)


def prepare_head_params(weight, bias, logit_scale, *, weight_dtype=jnp.bfloat16):
    """One-time conversion of nn.Linear(D, C) + logit_scale for the kernel.

    weight [C, D] (PyTorch layout) -> transposed to [D, C], zero-padded to
    lane-aligned multiples of 128, cast to bf16 (half the weight HBM stream,
    2x MXU rate; accumulation stays f32 in-kernel).
    bias -> bias * exp(logit_scale), zero-padded, shape [1, Cp] f32.
    Returns (w_t, bias_scaled, scale, num_classes) with scale = exp(logit_scale).
    Call once at init, not per forward.
    """
    C, D = weight.shape
    Dp = _round_up(D, 128)
    Cp = _round_up(C, 128)
    scale = float(np.exp(float(logit_scale)))
    w_t = jnp.asarray(weight, jnp.float32).T                      # [D, C], once
    w_t = jnp.pad(w_t, ((0, Dp - D), (0, Cp - C))).astype(weight_dtype)
    b = jnp.asarray(bias, jnp.float32) * scale                    # fold exp(ls)
    b = jnp.pad(b, (0, Cp - C)).reshape(1, Cp)
    return w_t, b, scale, C


def _choose_tiles(B, Dp, Cp, out_itemsize):
    # Batch tile: a single tile when B is small; otherwise the largest of
    # {512, 256, 128, 64} wasting <= 1/8 of the padded rows, else the one
    # minimizing padding.
    if B <= 512:
        tm = _round_up(B, 8)
    else:
        tm, best = None, None
        for c in (512, 256, 128, 64):
            Bp = _round_up(B, c)
            if best is None or Bp < best[1]:
                best = (c, Bp)
            if (Bp - B) * 8 <= Bp:
                tm = c
                break
        if tm is None:
            tm = best[0]
    # Class tile: largest of {512, 256, 128} dividing Cp (Cp % 128 == 0 always).
    tn = 512 if Cp % 512 == 0 else (256 if Cp % 256 == 0 else 128)

    # Shrink tiles only if the double-buffered working set would exceed a
    # conservative budget (v7x: 64 MiB physical per TensorCore).
    # TODO(synk): for very large D (working set still too big at tn=128),
    # tile K with an f32 acc scratch + pl.when init/finalize instead of
    # shrinking tm further.
    budget = 48 << 20

    def working_set(tm_, tn_):
        return (2 * tm_ * Dp * 2            # x tile (bf16), double-buffered
                + 2 * Dp * tn_ * 2          # weight tile (bf16)
                + 2 * tm_ * tn_ * out_itemsize
                + 2 * tm_ * 4 + 2 * tn_ * 4)  # inv_norm / bias tiles

    while working_set(tm, tn) > budget and tn > 128:
        tn //= 2
    while working_set(tm, tn) > budget and tm > 64:
        tm = max(64, _round_up(tm // 2, 8))
    return tm, tn, working_set(tm, tn)


def logit_head(x, w_t, bias_scaled, scale, num_classes, *, out_dtype=jnp.float32):
    """x: [B, D]; w_t: [Dp, Cp] bf16 and bias_scaled: [1, Cp] f32 from
    prepare_head_params(); scale = exp(logit_scale); num_classes = C.
    Set out_dtype=jnp.bfloat16 if the downstream loss accepts bf16 logits."""
    B, D = x.shape
    Dp, Cp = w_t.shape
    out_itemsize = jnp.dtype(out_dtype).itemsize

    tm, tn, ws_bytes = _choose_tiles(B, Dp, Cp, out_itemsize)
    Bp = _round_up(B, tm)

    # Row norm hoisted out of the kernel (it would otherwise be recomputed
    # for every class tile, stealing XLU/VALU slots from the MXU): tiny
    # [Bp, 1] f32 input, accumulated in f32, exp(logit_scale) folded in.
    # min(rsqrt, 1e12) reproduces F.normalize's eps=1e-12 clamp (all-zero
    # rows stay zero, no inf/nan).
    xf = x.astype(jnp.float32)
    sq = jnp.sum(xf * xf, axis=1, keepdims=True)
    inv_norm = jnp.minimum(lax.rsqrt(sq), 1e12) * scale
    if Bp != B:
        inv_norm = jnp.pad(inv_norm, ((0, Bp - B), (0, 0)))

    # Stream x as bf16 (half the HBM bytes and half the resident VMEM);
    # pad only when actually needed.
    x_bf = x if x.dtype == jnp.bfloat16 else x.astype(jnp.bfloat16)
    if Bp != B or Dp != D:
        x_bf = jnp.pad(x_bf, ((0, Bp - B), (0, Dp - D)))

    n_j, n_i = Cp // tn, Bp // tm
    # Classes outermost, batch innermost: the weight (and bias) block index
    # depends only on j, so the pipeline keeps that tile resident across the
    # whole inner batch sweep -> W^T is read from HBM exactly once.
    grid = (n_j, n_i)

    grid_spec = pltpu.PrefetchScalarGridSpec(
        num_scalar_prefetch=0,
        grid=grid,
        in_specs=[
            pl.BlockSpec((tm, Dp), lambda j, i: (i, 0)),   # x rows (bf16)
            pl.BlockSpec((Dp, tn), lambda j, i: (0, j)),   # W^T cols, reused over i
            pl.BlockSpec((tm, 1), lambda j, i: (i, 0)),    # inv_norm * exp(ls)
            pl.BlockSpec((1, tn), lambda j, i: (0, j)),    # bias * exp(ls)
        ],
        out_specs=pl.BlockSpec((tm, tn), lambda j, i: (i, j)),
    )

    flops = 2 * Bp * Dp * Cp
    bytes_accessed = (n_j * Bp * Dp * 2      # x streamed once per class tile
                      + Dp * Cp * 2          # W^T streamed exactly once
                      + n_j * Bp * 4         # inv_norm per class tile
                      + Cp * 4               # bias once
                      + Bp * Cp * out_itemsize)

    vmem_limit = max(min(int(ws_bytes * 1.5) + (2 << 20), 96 << 20), 16 << 20)

    out = pl.pallas_call(
        logit_head_kernel,
        out_shape=jax.ShapeDtypeStruct((Bp, Cp), out_dtype),
        grid_spec=grid_spec,
        compiler_params=pltpu.CompilerParams(
            # Class axis parallel: on v7x each TensorCore gets disjoint weight
            # columns (each streams half of W^T).  Batch axis arbitrary.
            dimension_semantics=("parallel", "arbitrary"),
            vmem_limit_bytes=vmem_limit,
        ),
        cost_estimate=pl.CostEstimate(
            flops=flops, transcendentals=0, bytes_accessed=bytes_accessed),
    )(x_bf, w_t, inv_norm, bias_scaled)

    return out[:B, :num_classes]


def logit_head_ref(x, weight, bias, logit_scale):
    # pure-JAX f32 reference matching PyTorch semantics
    norm = jnp.sqrt(jnp.sum(x * x, axis=1, keepdims=True))
    xn = x / jnp.maximum(norm, 1e-12)
    logits = xn @ weight.T + bias
    return logits * jnp.exp(logit_scale)


if __name__ == "__main__":
    key = jax.random.PRNGKey(0)
    k_x, k_w, k_b = jax.random.split(key, 3)

    B, D, C = 8, 32, 16                      # small shapes: batch, feature dim, classes
    logit_scale = float(np.log(1.0 / 0.07))  # as in module __init__

    x = jax.random.normal(k_x, (B, D), dtype=jnp.float32)
    # deterministic "head" params (nn.Linear(D, C)): uniform(-1/sqrt(D), 1/sqrt(D))
    bound = 1.0 / np.sqrt(D)
    weight = jax.random.uniform(k_w, (C, D), jnp.float32, -bound, bound)
    bias = jax.random.uniform(k_b, (C,), jnp.float32, -bound, bound)

    # One-time parameter preparation (transpose + pad + bf16 cast + scale fold).
    w_t, b_scaled, scale, n_classes = prepare_head_params(weight, bias, logit_scale)

    out = logit_head(x, w_t, b_scaled, scale, n_classes)
    out = jax.block_until_ready(out)

    ref = logit_head_ref(x, weight, bias, logit_scale)
    # bf16 matmul inputs (f32 accumulation) -> tolerance at bf16 precision.
    np.testing.assert_allclose(np.asarray(out), np.asarray(ref), rtol=2e-2, atol=5e-2)

    print("KERNEL_OK")
</pallas_src>

<mosaic_0001>
module attributes {stable_mosaic.version = 11 : i64} {
  func.func @logit_head_kernel(%arg0: i32, %arg1: i32, %arg2: memref<8x128xbf16, #tpu.memory_space<vmem>>, %arg3: memref<128x128xbf16, #tpu.memory_space<vmem>>, %arg4: memref<8x1xf32, #tpu.memory_space<vmem>>, %arg5: memref<1x128xf32, #tpu.memory_space<vmem>>, %arg6: memref<8x128xf32, #tpu.memory_space<vmem>>) attributes {dimension_semantics = [#tpu.dimension_semantics<parallel>, #tpu.dimension_semantics<arbitrary>], iteration_bounds = array<i64: 1, 1>, scalar_prefetch = 0 : i64, scratch_operands = 0 : i64, tpu.core_type = #tpu.core_type<tc>, window_params = [{transform_indices = @transform_0, window_bounds = array<i64: 8, 128>}, {transform_indices = @transform_1, window_bounds = array<i64: 128, 128>}, {transform_indices = @transform_2, window_bounds = array<i64: 8, 1>}, {transform_indices = @transform_3, window_bounds = array<i64: 1, 128>}, {transform_indices = @transform_4, window_bounds = array<i64: 8, 128>}]} {
    %c0 = arith.constant 0 : index
    %c0_0 = arith.constant 0 : index
    %0 = vector.load %arg2[%c0, %c0_0] : memref<8x128xbf16, #tpu.memory_space<vmem>>, vector<8x128xbf16>
    %c0_1 = arith.constant 0 : index
    %c0_2 = arith.constant 0 : index
    %1 = vector.load %arg3[%c0_1, %c0_2] : memref<128x128xbf16, #tpu.memory_space<vmem>>, vector<128x128xbf16>
    %cst = arith.constant dense<0.000000e+00> : vector<8x128xf32>
    %2 = tpu.matmul %0, %1, %cst {dimension_numbers = #tpu.dot_dimension_numbers<[1], [0], [0], [1], [0, 0, 1, 1], [], []>} : vector<8x128xbf16>, vector<128x128xbf16>, vector<8x128xf32> -> vector<8x128xf32>
    %c0_3 = arith.constant 0 : index
    %c0_4 = arith.constant 0 : index
    %3 = vector.load %arg4[%c0_3, %c0_4] : memref<8x1xf32, #tpu.memory_space<vmem>>, vector<8x1xf32>
    %4 = vector.broadcast %3 : vector<8x1xf32> to vector<8x128xf32>
    %5 = arith.mulf %2, %4 : vector<8x128xf32>
    %c0_5 = arith.constant 0 : index
    %c0_6 = arith.constant 0 : index
    %6 = vector.load %arg5[%c0_5, %c0_6] : memref<1x128xf32, #tpu.memory_space<vmem>>, vector<1x128xf32>
    %7 = vector.broadcast %6 : vector<1x128xf32> to vector<8x128xf32>
    %8 = arith.addf %5, %7 : vector<8x128xf32>
    %c0_7 = arith.constant 0 : index
    %c0_8 = arith.constant 0 : index
    %9 = vector.load %arg6[%c0_7, %c0_8] : memref<8x128xf32, #tpu.memory_space<vmem>>, vector<8x128xf32>
    tpu.vector_store %arg6[%c0_7, %c0_8], %8 {strides = array<i32>} : memref<8x128xf32, #tpu.memory_space<vmem>>, vector<8x128xf32>,
    return
  }
  func.func @transform_0(%arg0: i32, %arg1: i32) -> (i32, i32) {
    %c0_i32 = arith.constant 0 : i32
    %c0_i32_0 = arith.constant 0 : i32
    return %arg1, %c0_i32 : i32, i32
  }
  func.func @transform_1(%arg0: i32, %arg1: i32) -> (i32, i32) {
    %c0_i32 = arith.constant 0 : i32
    %c0_i32_0 = arith.constant 0 : i32
    return %c0_i32, %arg0 : i32, i32
  }
  func.func @transform_2(%arg0: i32, %arg1: i32) -> (i32, i32) {
    %c0_i32 = arith.constant 0 : i32
    %c0_i32_0 = arith.constant 0 : i32
    return %arg1, %c0_i32 : i32, i32
  }
  func.func @transform_3(%arg0: i32, %arg1: i32) -> (i32, i32) {
    %c0_i32 = arith.constant 0 : i32
    %c0_i32_0 = arith.constant 0 : i32
    return %c0_i32, %arg0 : i32, i32
  }
  func.func @transform_4(%arg0: i32, %arg1: i32) -> (i32, i32) {
    %c0_i32 = arith.constant 0 : i32
    return %arg1, %arg0 : i32, i32
  }
}

</mosaic_0001>

<llo_original>
// kernel: tpu_custom_call.1
$region0: #{tpu_custom_call.1}
  #allocation0 [shape = 'u32[]', space=smem, size = 0x4, offset = 0x4, fixed_abs, tag = 'smem constant byte address 0x4 - core index']
  #allocation1 [shape = 'u32[144,128]{1,0:T(1,128)}', space=vmem, size = 0x12000, scoped, tag = 'internal scratch']
  %s0 = inlined_call_operand.vmem [shape: bf16[8,128], index: 0, kind: input, shape index: {}]
  %s1 = inlined_call_operand.hbm [shape: bf16[128,128], index: 1, kind: input, shape index: {}]
  %s2 = inlined_call_operand.vmem [shape: f32[8,1], index: 2, kind: input, shape index: {}]
  %s3 = inlined_call_operand.vmem [shape: f32[1,128], index: 3, kind: input, shape index: {}]
  %s4 = inlined_call_operand.hbm [shape: f32[8,128], index: 4, kind: output, shape index: {}]
  %s5 = sld [smem:[#allocation0]]
  $region30: #{tpu_custom_call.1} parent=0
    _
  %s7 = ssub.s32 1, %s5
  %s8 = scalar_select 0, %s7, %s5
  $region1: #{tpu_custom_call.1} parent=0
    #allocation2 [shape = 'u8[32768]{0}', space=vmem, size = 0x8000, scoped, tag = 'input window, operand 1, single buffered']
    #allocation3 [shape = 's32[1]{0}', space=sflag, size = 0x4, scoped, tag = 'scoped memory for tpu_custom_call.1']
    #allocation4 [shape = 's32[1]{0}', space=sflag, size = 0x4, scoped, tag = 'scoped memory for tpu_custom_call.1']
    #allocation5 [shape = 'u8[4096]{0}', space=vmem, size = 0x1000, scoped, tag = 'output window, operand 0, single buffered']
    %9 = vsyncpa [#allocation3], 0
    %10 = vsyncpa [#allocation4], 0
    // Predicated region
    $region2: #{tpu_custom_call.1} parent=1 // pred_check
      _
    $region3: #{tpu_custom_call.1} parent=1 // pred_check_branch
      %12 = sbr.rel (0) target = $region5
    $region4: #{tpu_custom_call.1} parent=1 // pred_region
      _
    $region5: #{tpu_custom_call.1} parent=1 // pred_fallthru
      _
    // Predicated region
    $region6: #{tpu_custom_call.1} parent=1 // pred_check
      _
    $region7: #{tpu_custom_call.1} parent=1 // pred_check_branch
      %14 = sbr.rel (0) target = $region9
    $region8: #{tpu_custom_call.1} parent=1 // pred_region
      %s16 = ssub.s32 1024, 1024
      %17 = vsyncadd [#allocation3], %s16
      %s18 = sshll.u32 [#allocation2], 4
      %s19 = int_to_ptr.vmem [resolvable:$true] %s18
      %24 = dma.hbm_to_vmem [thread:$0]  %s1, 1024, %s19, [#allocation3], 64, 64, 4
    $region9: #{tpu_custom_call.1} parent=1 // pred_fallthru
      _
    // Predicated region
    $region10: #{tpu_custom_call.1} parent=1 // pred_check
      _
    $region11: #{tpu_custom_call.1} parent=1 // pred_check_branch
      %26 = sbr.rel (0) target = $region13
    $region12: #{tpu_custom_call.1} parent=1 // pred_region
      _
    $region13: #{tpu_custom_call.1} parent=1 // pred_fallthru
      _
    // Predicated region
    $region14: #{tpu_custom_call.1} parent=1 // pred_check
      _
    $region15: #{tpu_custom_call.1} parent=1 // pred_check_branch
      %28 = sbr.rel (0) target = $region17
    $region16: #{tpu_custom_call.1} parent=1 // pred_region
      _
    $region17: #{tpu_custom_call.1} parent=1 // pred_fallthru
      _
    // Predicated region
    $region18: #{tpu_custom_call.1} parent=1 // pred_check
      _
    $region19: #{tpu_custom_call.1} parent=1 // pred_check_branch
      %30 = sbr.rel (0) target = $region21
    $region20: #{tpu_custom_call.1} parent=1 // pred_region
      %31 = dma.done [#allocation3], 1024
    $region21: #{tpu_custom_call.1} parent=1 // pred_fallthru
      _
    %v33 = vld [vmem:[%s0] sm:$0xf]
    %v34 = vld [vmem:[#allocation2] sm:$0xf]
    %v35 = vld [vmem:[#allocation2 + $0x4] sm:$0xf]
    %v36 = vld [vmem:[#allocation2 + $0x8] sm:$0xf]
    %v37 = vld [vmem:[#allocation2 + $0xc] sm:$0xf]
    %v38 = vld [vmem:[#allocation2 + $0x10] sm:$0xf]
    %v39 = vld [vmem:[#allocation2 + $0x14] sm:$0xf]
    %v40 = vld [vmem:[#allocation2 + $0x18] sm:$0xf]
    %v41 = vld [vmem:[#allocation2 + $0x1c] sm:$0xf]
    %v42 = vld [vmem:[#allocation2 + $0x20] sm:$0xf]
    %v43 = vld [vmem:[#allocation2 + $0x24] sm:$0xf]
    %v44 = vld [vmem:[#allocation2 + $0x28] sm:$0xf]
    %v45 = vld [vmem:[#allocation2 + $0x2c] sm:$0xf]
    %v46 = vld [vmem:[#allocation2 + $0x30] sm:$0xf]
    %v47 = vld [vmem:[#allocation2 + $0x34] sm:$0xf]
    %v48 = vld [vmem:[#allocation2 + $0x38] sm:$0xf]
    %v49 = vld [vmem:[#allocation2 + $0x3c] sm:$0xf]
    %v66 = vunpack.c.l.b16 %v34
    %v67 = vunpack.c.l.b16 %v35
    %v68 = vunpack.c.l.b16 %v36
    %v69 = vunpack.c.l.b16 %v37
    %v70 = vunpack.c.l.b16 %v38
    %v71 = vunpack.c.l.b16 %v39
    %v72 = vunpack.c.l.b16 %v40
    %v73 = vunpack.c.l.b16 %v41
    %v74 = vunpack.c.l.b16 %v42
    %v75 = vunpack.c.l.b16 %v43
    %v76 = vunpack.c.l.b16 %v44
    %v77 = vunpack.c.l.b16 %v45
    %v78 = vunpack.c.l.b16 %v46
    %v79 = vunpack.c.l.b16 %v47
    %v80 = vunpack.c.l.b16 %v48
    %v81 = vunpack.c.l.b16 %v49
    %v82 = vpack.c.b16 %v67, %v66
    %v83 = vpack.c.b16 %v69, %v68
    %v84 = vpack.c.b16 %v71, %v70
    %v85 = vpack.c.b16 %v73, %v72
    %v86 = vpack.c.b16 %v75, %v74
    %v87 = vpack.c.b16 %v77, %v76
    %v88 = vpack.c.b16 %v79, %v78
    %v89 = vpack.c.b16 %v81, %v80
    %98 = vmatprep.subr.bf16.mxu0 0
    %99 = vmatpush1.bf16.msra.mxu0 %v82
    %100 = vmatprep.subr.bf16.mxu0 0
    %101 = vmatpush1.bf16.msra.mxu0 %v83
    %102 = vmatprep.subr.bf16.mxu0 0
    %103 = vmatpush1.bf16.msra.mxu0 %v84
    %104 = vmatprep.subr.bf16.mxu0 0
    %105 = vmatpush1.bf16.msra.mxu0 %v85
    %106 = vmatprep.subr.bf16.mxu0 0
    %107 = vmatpush1.bf16.msra.mxu0 %v86
    %108 = vmatprep.subr.bf16.mxu0 0
    %109 = vmatpush1.bf16.msra.mxu0 %v87
    %110 = vmatprep.subr.bf16.mxu0 0
    %111 = vmatpush1.bf16.msra.mxu0 %v88
    %112 = vmatprep.subr.bf16.mxu0 0
    %113 = vmatpush1.bf16.msra.mxu0 %v89
    %114 = vmatprep.subr.bf16.mxu0 0
    %115 = vmatpush1.bf16.msra.mxu0 0
    %116 = vmatprep.subr.bf16.mxu0 0
    %117 = vmatpush1.bf16.msra.mxu0 0
    %118 = vmatprep.subr.bf16.mxu0 0
    %119 = vmatpush1.bf16.msra.mxu0 0
    %120 = vmatprep.subr.bf16.mxu0 0
    %121 = vmatpush1.bf16.msra.mxu0 0
    %122 = vmatprep.subr.bf16.mxu0 0
    %123 = vmatpush1.bf16.msra.mxu0 0
    %124 = vmatprep.subr.bf16.mxu0 0
    %125 = vmatpush1.bf16.msra.mxu0 0
    %126 = vmatprep.subr.bf16.mxu0 0
    %127 = vmatpush1.bf16.msra.mxu0 0
    %128 = vmatprep.subr.bf16.mxu0 0
    %129 = vmatpush1.bf16.msra.mxu0 0
    %130 = vmatprep.mubr.bf16.mxu0 0
    %131 = vmatmul.mubr.bf16.gmra.mrb[0].mxu0 %v33
    %v132 = vpop.f32.mrb[0].mxu0
    %v133 = vadd.f32 0.0, %v132
    %v134 = vpop.f32.mrb[0].mxu0
    %v135 = vpop.f32.mrb[0].mxu0
    %v136 = vpop.f32.mrb[0].mxu0
    %137 = vdwg.mxu0
    %v138 = vld [vmem:[%s2] sm:$0xff]
    %140 = vset.pattern.permute.xlu0 0
    %141 = vperm.xlu0 %140, %v138
    %v142 = vpop.permute.xlu0 %141
    %v144 = vmul.f32 %v133, %v142
    %v145 = vld [vmem:[%s3] sm:$0x1]
    %v147 = vlaneseq
    %v148 = vshrl.u32 %v147, 7
    %v149 = vsub.s32 0, %v148
    %v150 = vrot.slane %v145, %v149
    %v152 = vadd.f32 %v144, %v150
    %153 = vst [vmem:[#allocation5] sm:$0xff] %v152
    // Predicated region
    $region22: #{tpu_custom_call.1} parent=1 // pred_check
      _
    $region23: #{tpu_custom_call.1} parent=1 // pred_check_branch
      %155 = sbr.rel (0) target = $region25
    $region24: #{tpu_custom_call.1} parent=1 // pred_region
      %s157 = ssub.s32 128, 128
      %158 = vsyncadd [#allocation4], %s157
      %s160 = sshll.u32 [#allocation5], 4
      %s161 = int_to_ptr.vmem [resolvable:$true] %s160
      %163 = dma.vmem_to_hbm [thread:$0]  %s161, 128, %s4, [#allocation4]
    $region25: #{tpu_custom_call.1} parent=1 // pred_fallthru
      _
    // Predicated region
    $region26: #{tpu_custom_call.1} parent=1 // pred_check
      _
    $region27: #{tpu_custom_call.1} parent=1 // pred_check_branch
      %165 = sbr.rel (0) target = $region29
    $region28: #{tpu_custom_call.1} parent=1 // pred_region
      %166 = dma.done [#allocation4], 128
    $region29: #{tpu_custom_call.1} parent=1 // pred_fallthru
      _
    %167 = vsyncpa [#allocation3], 1
    %168 = vsyncpa [#allocation4], 1

</llo_original>
